<compile_context>
chip_gen: v5e
topology: v5e:2x2
jax: 0.10.0
libtpu: 0.0.40
codegen_flags: <defaults>
</compile_context>

<pallas_src>
import functools

import jax
import jax.numpy as jnp
from jax.experimental import pallas as pl
from jax.experimental.pallas import tpu as pltpu


def _round_up(x, m):
    return (x + m - 1) // m * m


# ----------------------------- fused kernel ----------------------------------

def _encoder_fused_kernel(*refs, num_hidden):
    """One batch tile of the full encoder.

    refs layout:
      refs[0]                      : x tile            (tm, in_dim)
      refs[1 + 2*i], refs[2 + 2*i] : hidden W_i, b_i    (k_i, n_i), (1, n_i)
      refs[-3], refs[-2]           : fused head W, b    (k, 2*latent), (1, 2*latent)
      refs[-1]                     : output tile        (tm, 2*latent)
    """
    x_ref, out_ref = refs[0], refs[-1]
    x = x_ref[...].astype(jnp.float32)
    idx = 1
    for _ in range(num_hidden):
        w, b = refs[idx][...], refs[idx + 1][...]
        idx += 2
        x = jnp.dot(x, w, preferred_element_type=jnp.float32) + b
        x = jnp.maximum(x, 0.0)                      # ReLU, f32 epilogue
    wh, bh = refs[idx][...], refs[idx + 1][...]
    y = jnp.dot(x, wh, preferred_element_type=jnp.float32) + bh
    out_ref[...] = y.astype(out_ref.dtype)


# ----------------------------- wrapper ----------------------------------------

def base_encoder_forward(params, x, *, tm_max=512):
    """Equivalent of BaseEncoder.forward with activation='ReLU' (fused kernel)."""
    M, in_dim = x.shape
    hidden = params["hidden"]
    wm, bm = params["means"]
    wv, bv = params["log_var"]
    latent = wm.shape[1]

    # Merge the two heads into one lane-denser matmul: (K, 2*latent).
    wh = jnp.concatenate([wm, wv], axis=1)
    bh = jnp.concatenate([bm, bv], axis=0)

    # Batch tiling: tm multiple of 8; pad batch rows to a multiple of tm.
    tm = min(tm_max, _round_up(M, 8))
    Mp = _round_up(M, tm)
    xp = jnp.pad(x, ((0, Mp - M), (0, 0))) if Mp != M else x

    def resident(shape):
        # Same block index every grid step -> weight stays resident in VMEM.
        return pl.BlockSpec(shape, lambda i: tuple(0 for _ in shape))

    operands = [xp]
    in_specs = [pl.BlockSpec((tm, in_dim), lambda i: (i, 0))]
    for w, b in hidden:
        operands += [w, b.reshape(1, -1)]
        in_specs += [resident(w.shape), resident((1, b.shape[0]))]
    operands += [wh, bh.reshape(1, -1)]
    in_specs += [resident(wh.shape), resident((1, 2 * latent))]

    out = pl.pallas_call(
        functools.partial(_encoder_fused_kernel, num_hidden=len(hidden)),
        out_shape=jax.ShapeDtypeStruct((Mp, 2 * latent), x.dtype),
        grid=(Mp // tm,),
        in_specs=in_specs,
        out_specs=pl.BlockSpec((tm, 2 * latent), lambda i: (i, 0)),
        compiler_params=pltpu.CompilerParams(
            dimension_semantics=("parallel",)),
    )(*operands)

    out = out[:M]
    return out[:, :latent], out[:, latent:]


# ----------------------------- params / reference -----------------------------

def init_base_encoder(key, layer_dim_list, dtype=jnp.float32):
    """PyTorch-style init: U(-1/sqrt(fan_in), 1/sqrt(fan_in)).

    Weights are stored already transposed to (in, out).
    """
    assert len(layer_dim_list) >= 2, "insufficient layer dims"
    params = {"hidden": [], "means": None, "log_var": None}

    def lin_init(k, fan_in, fan_out):
        kw, kb = jax.random.split(k)
        bound = 1.0 / jnp.sqrt(jnp.asarray(fan_in, dtype))
        w = jax.random.uniform(kw, (fan_in, fan_out), dtype, -bound, bound)
        b = jax.random.uniform(kb, (fan_out,), dtype, -bound, bound)
        return w, b

    keys = jax.random.split(key, len(layer_dim_list) + 1)
    for i, (in_size, out_size) in enumerate(
            zip(layer_dim_list[:-2], layer_dim_list[1:-1])):
        params["hidden"].append(lin_init(keys[i], in_size, out_size))
    params["means"] = lin_init(keys[-2], layer_dim_list[-2], layer_dim_list[-1])
    params["log_var"] = lin_init(keys[-1], layer_dim_list[-2], layer_dim_list[-1])
    return params


def base_encoder_reference(params, x):
    for w, b in params["hidden"]:
        x = jnp.maximum(x @ w + b, 0.0)
    wm, bm = params["means"]
    wv, bv = params["log_var"]
    return x @ wm + bm, x @ wv + bv


# ----------------------------- main -------------------------------------------

if __name__ == "__main__":
    key = jax.random.PRNGKey(0)
    kx, kp = jax.random.split(key)

    # MLP encoder 32 -> 64 -> 48 -> latent 16
    layer_dim_list = [32, 64, 48, 16]
    batch = 8

    x = jax.random.normal(kx, (batch, layer_dim_list[0]), jnp.float32)
    params = init_base_encoder(kp, layer_dim_list)

    means, logvar = jax.jit(base_encoder_forward)(params, x)
    jax.block_until_ready((means, logvar))

    ref_means, ref_logvar = base_encoder_reference(params, x)
    assert means.shape == (batch, layer_dim_list[-1])
    assert logvar.shape == (batch, layer_dim_list[-1])
    assert jnp.allclose(means, ref_means, atol=1e-5, rtol=1e-5)
    assert jnp.allclose(logvar, ref_logvar, atol=1e-5, rtol=1e-5)

    # Also exercise batch tiling (grid > 1) + batch padding + resident weights.
    batch2 = 20   # not a multiple of the tile
    x2 = jax.random.normal(kx, (batch2, layer_dim_list[0]), jnp.float32)
    m2, v2 = jax.jit(functools.partial(base_encoder_forward, tm_max=8))(params, x2)
    jax.block_until_ready((m2, v2))
    rm2, rv2 = base_encoder_reference(params, x2)
    assert jnp.allclose(m2, rm2, atol=1e-5, rtol=1e-5)
    assert jnp.allclose(v2, rv2, atol=1e-5, rtol=1e-5)

    print("KERNEL_OK")
</pallas_src>

<mosaic_0001>
module attributes {stable_mosaic.version = 11 : i64} {
  func.func @_encoder_fused_kernel(%arg0: i32, %arg1: memref<8x32xf32, #tpu.memory_space<vmem>>, %arg2: memref<32x64xf32, #tpu.memory_space<vmem>>, %arg3: memref<1x64xf32, #tpu.memory_space<vmem>>, %arg4: memref<64x48xf32, #tpu.memory_space<vmem>>, %arg5: memref<1x48xf32, #tpu.memory_space<vmem>>, %arg6: memref<48x32xf32, #tpu.memory_space<vmem>>, %arg7: memref<1x32xf32, #tpu.memory_space<vmem>>, %arg8: memref<8x32xf32, #tpu.memory_space<vmem>>) attributes {dimension_semantics = [#tpu.dimension_semantics<parallel>], iteration_bounds = array<i64: 1>, scalar_prefetch = 0 : i64, scratch_operands = 0 : i64, tpu.core_type = #tpu.core_type<tc>, window_params = [{transform_indices = @transform_0, window_bounds = array<i64: 8, 32>}, {pipeline_mode = #tpu.pipeline_mode<synchronous>, transform_indices = @transform_1, window_bounds = array<i64: 32, 64>}, {pipeline_mode = #tpu.pipeline_mode<synchronous>, transform_indices = @transform_2, window_bounds = array<i64: 1, 64>}, {pipeline_mode = #tpu.pipeline_mode<synchronous>, transform_indices = @transform_3, window_bounds = array<i64: 64, 48>}, {pipeline_mode = #tpu.pipeline_mode<synchronous>, transform_indices = @transform_4, window_bounds = array<i64: 1, 48>}, {pipeline_mode = #tpu.pipeline_mode<synchronous>, transform_indices = @transform_5, window_bounds = array<i64: 48, 32>}, {pipeline_mode = #tpu.pipeline_mode<synchronous>, transform_indices = @transform_6, window_bounds = array<i64: 1, 32>}, {transform_indices = @transform_7, window_bounds = array<i64: 8, 32>}]} {
    %c0 = arith.constant 0 : index
    %c0_0 = arith.constant 0 : index
    %0 = vector.load %arg1[%c0, %c0_0] : memref<8x32xf32, #tpu.memory_space<vmem>>, vector<8x32xf32>
    %c0_1 = arith.constant 0 : index
    %c0_2 = arith.constant 0 : index
    %1 = vector.load %arg2[%c0_1, %c0_2] : memref<32x64xf32, #tpu.memory_space<vmem>>, vector<32x64xf32>
    %c0_3 = arith.constant 0 : index
    %c0_4 = arith.constant 0 : index
    %2 = vector.load %arg3[%c0_3, %c0_4] : memref<1x64xf32, #tpu.memory_space<vmem>>, vector<1x64xf32>
    %cst = arith.constant dense<0.000000e+00> : vector<8x64xf32>
    %3 = tpu.matmul %0, %1, %cst {dimension_numbers = #tpu.dot_dimension_numbers<[1], [0], [0], [1], [0, 0, 1, 1], [], []>} : vector<8x32xf32>, vector<32x64xf32>, vector<8x64xf32> -> vector<8x64xf32>
    %4 = vector.broadcast %2 : vector<1x64xf32> to vector<8x64xf32>
    %5 = arith.addf %3, %4 : vector<8x64xf32>
    %cst_5 = arith.constant 0.000000e+00 : f32
    %6 = vector.broadcast %cst_5 : f32 to vector<8x64xf32>
    %7 = arith.maximumf %5, %6 : vector<8x64xf32>
    %c0_6 = arith.constant 0 : index
    %c0_7 = arith.constant 0 : index
    %8 = vector.load %arg4[%c0_6, %c0_7] : memref<64x48xf32, #tpu.memory_space<vmem>>, vector<64x48xf32>
    %c0_8 = arith.constant 0 : index
    %c0_9 = arith.constant 0 : index
    %9 = vector.load %arg5[%c0_8, %c0_9] : memref<1x48xf32, #tpu.memory_space<vmem>>, vector<1x48xf32>
    %cst_10 = arith.constant dense<0.000000e+00> : vector<8x48xf32>
    %10 = tpu.matmul %7, %8, %cst_10 {dimension_numbers = #tpu.dot_dimension_numbers<[1], [0], [0], [1], [0, 0, 1, 1], [], []>} : vector<8x64xf32>, vector<64x48xf32>, vector<8x48xf32> -> vector<8x48xf32>
    %11 = vector.broadcast %9 : vector<1x48xf32> to vector<8x48xf32>
    %12 = arith.addf %10, %11 : vector<8x48xf32>
    %cst_11 = arith.constant 0.000000e+00 : f32
    %13 = vector.broadcast %cst_11 : f32 to vector<8x48xf32>
    %14 = arith.maximumf %12, %13 : vector<8x48xf32>
    %c0_12 = arith.constant 0 : index
    %c0_13 = arith.constant 0 : index
    %15 = vector.load %arg6[%c0_12, %c0_13] : memref<48x32xf32, #tpu.memory_space<vmem>>, vector<48x32xf32>
    %c0_14 = arith.constant 0 : index
    %c0_15 = arith.constant 0 : index
    %16 = vector.load %arg7[%c0_14, %c0_15] : memref<1x32xf32, #tpu.memory_space<vmem>>, vector<1x32xf32>
    %cst_16 = arith.constant dense<0.000000e+00> : vector<8x32xf32>
    %17 = tpu.matmul %14, %15, %cst_16 {dimension_numbers = #tpu.dot_dimension_numbers<[1], [0], [0], [1], [0, 0, 1, 1], [], []>} : vector<8x48xf32>, vector<48x32xf32>, vector<8x32xf32> -> vector<8x32xf32>
    %18 = vector.broadcast %16 : vector<1x32xf32> to vector<8x32xf32>
    %19 = arith.addf %17, %18 : vector<8x32xf32>
    %c0_17 = arith.constant 0 : index
    %c0_18 = arith.constant 0 : index
    %20 = vector.load %arg8[%c0_17, %c0_18] : memref<8x32xf32, #tpu.memory_space<vmem>>, vector<8x32xf32>
    tpu.vector_store %arg8[%c0_17, %c0_18], %19 {strides = array<i32>} : memref<8x32xf32, #tpu.memory_space<vmem>>, vector<8x32xf32>,
    return
  }
  func.func @transform_0(%arg0: i32) -> (i32, i32) {
    %c0_i32 = arith.constant 0 : i32
    %c0_i32_0 = arith.constant 0 : i32
    return %arg0, %c0_i32 : i32, i32
  }
  func.func @transform_1(%arg0: i32) -> (i32, i32) {
    %c0_i32 = arith.constant 0 : i32
    %c0_i32_0 = arith.constant 0 : i32
    %c0_i32_1 = arith.constant 0 : i32
    return %c0_i32, %c0_i32_0 : i32, i32
  }
  func.func @transform_2(%arg0: i32) -> (i32, i32) {
    %c0_i32 = arith.constant 0 : i32
    %c0_i32_0 = arith.constant 0 : i32
    %c0_i32_1 = arith.constant 0 : i32
    return %c0_i32, %c0_i32_0 : i32, i32
  }
  func.func @transform_3(%arg0: i32) -> (i32, i32) {
    %c0_i32 = arith.constant 0 : i32
    %c0_i32_0 = arith.constant 0 : i32
    %c0_i32_1 = arith.constant 0 : i32
    return %c0_i32, %c0_i32_0 : i32, i32
  }
  func.func @transform_4(%arg0: i32) -> (i32, i32) {
    %c0_i32 = arith.constant 0 : i32
    %c0_i32_0 = arith.constant 0 : i32
    %c0_i32_1 = arith.constant 0 : i32
    return %c0_i32, %c0_i32_0 : i32, i32
  }
  func.func @transform_5(%arg0: i32) -> (i32, i32) {
    %c0_i32 = arith.constant 0 : i32
    %c0_i32_0 = arith.constant 0 : i32
    %c0_i32_1 = arith.constant 0 : i32
    return %c0_i32, %c0_i32_0 : i32, i32
  }
  func.func @transform_6(%arg0: i32) -> (i32, i32) {
    %c0_i32 = arith.constant 0 : i32
    %c0_i32_0 = arith.constant 0 : i32
    %c0_i32_1 = arith.constant 0 : i32
    return %c0_i32, %c0_i32_0 : i32, i32
  }
  func.func @transform_7(%arg0: i32) -> (i32, i32) {
    %c0_i32 = arith.constant 0 : i32
    %c0_i32_0 = arith.constant 0 : i32
    return %arg0, %c0_i32 : i32, i32
  }
}

</mosaic_0001>

<llo_original>
// kernel: base_encoder_forward.1
$region0: #{base_encoder_forward.1}
  #allocation0 [shape = 'u32[]', space=smem, size = 0x4, offset = 0x4, fixed_abs, tag = 'smem constant byte address 0x4 - core index']
  #allocation1 [shape = 'u32[72,128]{1,0:T(1,128)}', space=vmem, size = 0x9000, scoped, tag = 'internal scratch']
  %s0 = inlined_call_operand.vmem [shape: f32[8,32], index: 0, kind: input, shape index: {}]
  %s1 = inlined_call_operand.vmem [shape: f32[32,64], index: 1, kind: input, shape index: {}]
  %s2 = inlined_call_operand.vmem [shape: f32[1,64], index: 2, kind: input, shape index: {}]
  %s3 = inlined_call_operand.vmem [shape: f32[64,48], index: 3, kind: input, shape index: {}]
  %s4 = inlined_call_operand.vmem [shape: f32[1,48], index: 4, kind: input, shape index: {}]
  %s5 = inlined_call_operand.vmem [shape: f32[48,32], index: 5, kind: input, shape index: {}]
  %s6 = inlined_call_operand.vmem [shape: f32[1,32], index: 6, kind: input, shape index: {}]
  %s7 = inlined_call_operand.vmem [shape: f32[8,32], index: 7, kind: output, shape index: {}]
  %s8 = sld [smem:[#allocation0]]
  $region38: #{base_encoder_forward.1} parent=0
    _
  %s10 = ssub.s32 1, %s8
  %s11 = scalar_select 0, %s10, %s8
  // Predicated region
  $region2: #{base_encoder_forward.1} parent=0 // pred_check
    _
  $region3: #{base_encoder_forward.1} parent=0 // pred_check_branch
    %13 = sbr.rel (0) target = $region5
  $region4: #{base_encoder_forward.1} parent=0 // pred_region
    _
  $region5: #{base_encoder_forward.1} parent=0 // pred_fallthru
    _
  // Predicated region
  $region6: #{base_encoder_forward.1} parent=0 // pred_check
    _
  $region7: #{base_encoder_forward.1} parent=0 // pred_check_branch
    %15 = sbr.rel (0) target = $region9
  $region8: #{base_encoder_forward.1} parent=0 // pred_region
    _
  $region9: #{base_encoder_forward.1} parent=0 // pred_fallthru
    _
  // Predicated region
  $region10: #{base_encoder_forward.1} parent=0 // pred_check
    _
  $region11: #{base_encoder_forward.1} parent=0 // pred_check_branch
    %17 = sbr.rel (0) target = $region13
  $region12: #{base_encoder_forward.1} parent=0 // pred_region
    _
  $region13: #{base_encoder_forward.1} parent=0 // pred_fallthru
    _
  // Predicated region
  $region14: #{base_encoder_forward.1} parent=0 // pred_check
    _
  $region15: #{base_encoder_forward.1} parent=0 // pred_check_branch
    %19 = sbr.rel (0) target = $region17
  $region16: #{base_encoder_forward.1} parent=0 // pred_region
    _
  $region17: #{base_encoder_forward.1} parent=0 // pred_fallthru
    _
  // Predicated region
  $region18: #{base_encoder_forward.1} parent=0 // pred_check
    _
  $region19: #{base_encoder_forward.1} parent=0 // pred_check_branch
    %21 = sbr.rel (0) target = $region21
  $region20: #{base_encoder_forward.1} parent=0 // pred_region
    _
  $region21: #{base_encoder_forward.1} parent=0 // pred_fallthru
    _
  // Predicated region
  $region22: #{base_encoder_forward.1} parent=0 // pred_check
    _
  $region23: #{base_encoder_forward.1} parent=0 // pred_check_branch
    %23 = sbr.rel (0) target = $region25
  $region24: #{base_encoder_forward.1} parent=0 // pred_region
    _
  $region25: #{base_encoder_forward.1} parent=0 // pred_fallthru
    _
  // Predicated region
  $region26: #{base_encoder_forward.1} parent=0 // pred_check
    _
  $region27: #{base_encoder_forward.1} parent=0 // pred_check_branch
    %25 = sbr.rel (0) target = $region29
  $region28: #{base_encoder_forward.1} parent=0 // pred_region
    _
  $region29: #{base_encoder_forward.1} parent=0 // pred_fallthru
    _
  %v26 = vld [vmem:[%s0] sm:$0xff]
  %v27 = vld [vmem:[%s1] sm:$0xff]
  %v28 = vld [vmem:[%s1 + $0x8] sm:$0xff]
  %v29 = vld [vmem:[%s1 + $0x10] sm:$0xff]
  %v30 = vld [vmem:[%s1 + $0x18] sm:$0xff]
  %v31 = vld [vmem:[%s2] sm:$0x1]
  %v33 = vperm.slane %v31, 0
  %vm35 = vcmask 261120
  %v37 = vsel %vm35, %v26, 0
  %39 = vmatpush.msra.mxu0 0.0
  %40 = vmatpush.msra.mxu0 0.0
  %41 = vmatpush.msra.mxu0 0.0
  %42 = vmatpush.msra.mxu0 0.0
  %43 = vmatpush.msra.mxu0 0.0
  %44 = vmatpush.msra.mxu0 0.0
  %45 = vmatpush.msra.mxu0 0.0
  %46 = vmatpush.msra.mxu0 0.0
  %47 = vmatpush.msra.mxu0 0.0
  %48 = vmatpush.msra.mxu0 0.0
  %49 = vmatpush.msra.mxu0 0.0
  %50 = vmatpush.msra.mxu0 0.0
  %51 = vmatpush.msra.mxu0 %v30
  %52 = vmatpush.msra.mxu0 %v29
  %53 = vmatpush.msra.mxu0 %v28
  %54 = vmatpush.msra.mxu0 %v27
  %55 = vmatmul.f32.gmra.mxu0 %v37
  %v56 = vpop.f32.mrf.mxu0
  %v57 = vadd.f32 %v33, %v56
  %58 = vdwg.mxu0
  %v59 = vmax.f32 %v57, 0.0
  %v60 = vld [vmem:[%s3] sm:$0xff]
  %v61 = vld [vmem:[%s3 + $0x8] sm:$0xff]
  %v62 = vld [vmem:[%s3 + $0x10] sm:$0xff]
  %v63 = vld [vmem:[%s3 + $0x18] sm:$0xff]
  %v64 = vld [vmem:[%s3 + $0x20] sm:$0xff]
  %v65 = vld [vmem:[%s3 + $0x28] sm:$0xff]
  %v66 = vld [vmem:[%s3 + $0x30] sm:$0xff]
  %v67 = vld [vmem:[%s3 + $0x38] sm:$0xff]
  %v68 = vld [vmem:[%s4] sm:$0x1]
  %v70 = vperm.slane %v68, 0
  %vm72 = vcmask 523264
  %v74 = vsel %vm72, %v59, 0
  %76 = vmatpush.msra.mxu0 0.0
  %77 = vmatpush.msra.mxu0 0.0
  %78 = vmatpush.msra.mxu0 0.0
  %79 = vmatpush.msra.mxu0 0.0
  %80 = vmatpush.msra.mxu0 0.0
  %81 = vmatpush.msra.mxu0 0.0
  %82 = vmatpush.msra.mxu0 0.0
  %83 = vmatpush.msra.mxu0 0.0
  %84 = vmatpush.msra.mxu0 %v67
  %85 = vmatpush.msra.mxu0 %v66
  %86 = vmatpush.msra.mxu0 %v65
  %87 = vmatpush.msra.mxu0 %v64
  %88 = vmatpush.msra.mxu0 %v63
  %89 = vmatpush.msra.mxu0 %v62
  %90 = vmatpush.msra.mxu0 %v61
  %91 = vmatpush.msra.mxu0 %v60
  %92 = vmatmul.f32.gmra.mxu0 %v74
  %v93 = vpop.f32.mrf.mxu0
  %v94 = vadd.f32 %v70, %v93
  %95 = vdwg.mxu0
  %v96 = vmax.f32 %v94, 0.0
  %v97 = vld [vmem:[%s5] sm:$0xff]
  %v98 = vld [vmem:[%s5 + $0x8] sm:$0xff]
  %v99 = vld [vmem:[%s5 + $0x10] sm:$0xff]
  %v100 = vld [vmem:[%s5 + $0x18] sm:$0xff]
  %v101 = vld [vmem:[%s5 + $0x20] sm:$0xff]
  %v102 = vld [vmem:[%s5 + $0x28] sm:$0xff]
  %v103 = vld [vmem:[%s6] sm:$0x1]
  %v105 = vperm.slane %v103, 0
  %vm107 = vcmask 392192
  %v109 = vsel %vm107, %v96, 0
  %111 = vmatpush.msra.mxu0 0.0
  %112 = vmatpush.msra.mxu0 0.0
  %113 = vmatpush.msra.mxu0 0.0
  %114 = vmatpush.msra.mxu0 0.0
  %115 = vmatpush.msra.mxu0 0.0
  %116 = vmatpush.msra.mxu0 0.0
  %117 = vmatpush.msra.mxu0 0.0
  %118 = vmatpush.msra.mxu0 0.0
  %119 = vmatpush.msra.mxu0 0.0
  %120 = vmatpush.msra.mxu0 0.0
  %121 = vmatpush.msra.mxu0 %v102
  %122 = vmatpush.msra.mxu0 %v101
  %123 = vmatpush.msra.mxu0 %v100
  %124 = vmatpush.msra.mxu0 %v99
  %125 = vmatpush.msra.mxu0 %v98
  %126 = vmatpush.msra.mxu0 %v97
  %127 = vmatmul.f32.gmra.mxu0 %v109
  %v128 = vpop.f32.mrf.mxu0
  %v129 = vadd.f32 %v105, %v128
  %130 = vdwg.mxu0
  %131 = vst.msk [vmem:[%s7] sm:$0xff] %vm35, %v129
  // Predicated region
  $region30: #{base_encoder_forward.1} parent=0 // pred_check
    _
  $region31: #{base_encoder_forward.1} parent=0 // pred_check_branch
    %133 = sbr.rel (0) target = $region33
  $region32: #{base_encoder_forward.1} parent=0 // pred_region
    _
  $region33: #{base_encoder_forward.1} parent=0 // pred_fallthru
    _
  // Predicated region
  $region34: #{base_encoder_forward.1} parent=0 // pred_check
    _
  $region35: #{base_encoder_forward.1} parent=0 // pred_check_branch
    %135 = sbr.rel (0) target = $region37
  $region36: #{base_encoder_forward.1} parent=0 // pred_region
    _
  $region37: #{base_encoder_forward.1} parent=0 // pred_fallthru
    _

</llo_original>
